<compile_context>
chip_gen: v6e
topology: v6e:2x2x1
jax: 0.10.0
libtpu: 0.0.40
codegen_flags: <defaults>
</compile_context>

<pallas_src>
import functools

import jax
import jax.numpy as jnp
from jax.experimental import pallas as pl
from jax.experimental.pallas import tpu as pltpu


def _double_loss_kernel(b_ref, t_ref, bw_ref, ct_ref, cw_ref, out_ref,
                        acc_bce, acc_num, acc_den, *, n_total):
    """One TN-wide tile of the fused loss.

    b_ref  : (1, TN) f32  binary probabilities
    t_ref  : (1, TN) i32  labels in {0..K}; 0 == background
    bw_ref : (1, TN) f32  per-element BCE weight (0 on padded lanes)
    ct_ref : (K, TN) f32  class probabilities, classes on sublanes
    cw_ref : (K, 1)  f32  per-class NLL weight
    out_ref: (1, 1)  f32  scalar loss (written on last grid step)
    acc_*  : (1, TN) f32  per-lane running sums
    """
    i = pl.program_id(0)

    @pl.when(i == 0)
    def _init():
        acc_bce[...] = jnp.zeros_like(acc_bce)
        acc_num[...] = jnp.zeros_like(acc_num)
        acc_den[...] = jnp.zeros_like(acc_den)

    t = t_ref[...]                                   # (1, TN) int32
    b = b_ref[...].astype(jnp.float32)               # (1, TN)
    bw = bw_ref[...].astype(jnp.float32)             # (1, TN)

    # ---- binary cross entropy: select prob first, single log, PyTorch clamp ----
    bin_true = t > 0
    sel = jnp.where(bin_true, b, 1.0 - b)
    log_sel = jnp.maximum(jnp.log(sel), -100.0)
    acc_bce[...] += bw * (-log_sel)

    # ---- weighted NLL over foreground (true != 0) rows ----
    tgt = t - 1                                      # (1, TN); -1 on background
    cls = jax.lax.broadcasted_iota(jnp.int32, ct_ref.shape, 0)   # (K, TN)
    onehot = (cls == tgt).astype(jnp.float32)                    # (K, TN)
    c = ct_ref[...].astype(jnp.float32)
    cw = cw_ref[...].astype(jnp.float32)                         # (K, 1)
    picked_c = jnp.sum(onehot * c, axis=0, keepdims=True)        # (1, TN)
    picked_w = jnp.sum(onehot * cw, axis=0, keepdims=True)       # (1, TN)

    fg = t != 0
    mask = fg.astype(jnp.float32)
    safe_c = jnp.where(fg, picked_c, 1.0)            # keep log finite on masked rows
    log_c = jnp.log(safe_c)                          # only N logs, not N*K
    acc_num[...] += mask * (-picked_w * log_c)
    acc_den[...] += mask * picked_w

    @pl.when(i == pl.num_programs(0) - 1)
    def _finalize():
        bce_sum = jnp.sum(acc_bce[...], axis=1, keepdims=True)   # (1, 1)
        num = jnp.sum(acc_num[...], axis=1, keepdims=True)       # (1, 1)
        den = jnp.sum(acc_den[...], axis=1, keepdims=True)       # (1, 1)
        # NOTE: den == 0 (no foreground element) yields NaN, matching masked NLL.
        out_ref[...] = bce_sum * (1.0 / n_total) + num / den


def double_loss(pred, true, b_weight, c_weight, *, tile_n=512):
    """JAX/Pallas equivalent of the PyTorch double_loss.forward."""
    B_probs, C_probs = pred
    N, K = C_probs.shape

    # Choose a lane-dense tile width (multiple of 128) and pad N up to it.
    tn = int(tile_n)
    if N < tn:
        tn = max(128, pl.cdiv(N, 128) * 128)
    n_pad = pl.cdiv(N, tn) * tn
    pad = n_pad - N
    n_blocks = n_pad // tn

    # Lane-dense reshapes.  Padded lanes: label 0 + zero BCE weight => zero
    # contribution to every accumulated term.
    b_row = jnp.pad(B_probs.reshape(1, N), ((0, 0), (0, pad)), constant_values=0.5)
    t_row = jnp.pad(true.astype(jnp.int32).reshape(1, N), ((0, 0), (0, pad)),
                    constant_values=0)
    bw_row = jnp.pad(jnp.broadcast_to(b_weight, (N,)).reshape(1, N),
                     ((0, 0), (0, pad)), constant_values=0.0)
    ct = jnp.pad(C_probs.T, ((0, 0), (0, pad)), constant_values=1.0)   # (K, N_pad)
    cw_col = c_weight.reshape(K, 1)

    grid_spec = pltpu.PrefetchScalarGridSpec(
        num_scalar_prefetch=0,
        grid=(n_blocks,),
        in_specs=[
            pl.BlockSpec((1, tn), lambda i: (0, i)),    # B probs
            pl.BlockSpec((1, tn), lambda i: (0, i)),    # labels
            pl.BlockSpec((1, tn), lambda i: (0, i)),    # b_weight
            pl.BlockSpec((K, tn), lambda i: (0, i)),    # class probs (K, N)
            pl.BlockSpec((K, 1), lambda i: (0, 0)),     # c_weight
        ],
        out_specs=pl.BlockSpec((1, 1), lambda i: (0, 0)),
        scratch_shapes=[pltpu.VMEM((1, tn), jnp.float32)] * 3,
    )

    out = pl.pallas_call(
        functools.partial(_double_loss_kernel, n_total=float(N)),
        out_shape=jax.ShapeDtypeStruct((1, 1), jnp.float32),
        grid_spec=grid_spec,
        compiler_params=pltpu.CompilerParams(
            dimension_semantics=("arbitrary",)),
    )(b_row, t_row, bw_row, ct, cw_col)
    return out[0, 0]


def _reference(pred, true, b_weight, c_weight):
    """Pure-JAX reference mirroring the PyTorch semantics (incl. BCE log clamp)."""
    B_probs, C_probs = pred
    N, K = C_probs.shape
    t = true.astype(jnp.int32)
    bin_true = (t > 0).astype(jnp.float32)
    log_b = jnp.maximum(jnp.log(B_probs), -100.0)
    log_1mb = jnp.maximum(jnp.log(1.0 - B_probs), -100.0)
    bce = -(bin_true * log_b + (1.0 - bin_true) * log_1mb)
    binary_loss = jnp.mean(b_weight * bce)

    mask = (t != 0)
    tgt = jnp.clip(t - 1, 0, K - 1)
    logp = jnp.log(C_probs)[jnp.arange(N), tgt]          # log C[i, true_i - 1]
    w = c_weight[tgt]
    m = mask.astype(jnp.float32)
    class_loss = jnp.sum(m * (-w * logp)) / jnp.sum(m * w)
    return binary_loss + class_loss


if __name__ == "__main__":
    key = jax.random.PRNGKey(0)
    k1, k2, k3, k4, k5 = jax.random.split(key, 5)

    # N samples, K foreground classes (labels 1..K, 0 = negative).
    # N deliberately not a multiple of 128 to exercise padding, and tile_n=128
    # to exercise multi-step grid accumulation.
    N, K = 500, 8

    B_probs = jax.nn.sigmoid(jax.random.normal(k1, (N,), dtype=jnp.float32))
    C_probs = jax.nn.softmax(jax.random.normal(k2, (N, K), dtype=jnp.float32), axis=-1)
    true = jax.random.randint(k3, (N,), 0, K + 1, dtype=jnp.int32)

    # deterministic "parameters" of the loss module
    b_weight = 0.5 + jax.random.uniform(k4, (N,), dtype=jnp.float32)   # per-element BCE weight
    c_weight = 0.5 + jax.random.uniform(k5, (K,), dtype=jnp.float32)   # per-class NLL weight

    out = double_loss((B_probs, C_probs), true, b_weight, c_weight, tile_n=128)
    out = jax.block_until_ready(out)

    ref = _reference((B_probs, C_probs), true, b_weight, c_weight)
    assert jnp.allclose(out, ref, rtol=1e-5, atol=1e-5), (out, ref)

    print("KERNEL_OK")
</pallas_src>

<mosaic_0001>
module attributes {stable_mosaic.version = 11 : i64} {
  func.func @_double_loss_kernel(%arg0: i32, %arg1: memref<1x128xf32, #tpu.memory_space<vmem>>, %arg2: memref<1x128xi32, #tpu.memory_space<vmem>>, %arg3: memref<1x128xf32, #tpu.memory_space<vmem>>, %arg4: memref<8x128xf32, #tpu.memory_space<vmem>>, %arg5: memref<8x1xf32, #tpu.memory_space<vmem>>, %arg6: memref<1x1xf32, #tpu.memory_space<vmem>>, %arg7: memref<1x128xf32, #tpu.memory_space<vmem>>, %arg8: memref<1x128xf32, #tpu.memory_space<vmem>>, %arg9: memref<1x128xf32, #tpu.memory_space<vmem>>) attributes {dimension_semantics = [#tpu.dimension_semantics<arbitrary>], iteration_bounds = array<i64: 4>, scalar_prefetch = 0 : i64, scratch_operands = 3 : i64, tpu.core_type = #tpu.core_type<tc>, window_params = [{transform_indices = @transform_0, window_bounds = array<i64: 1, 128>}, {transform_indices = @transform_1, window_bounds = array<i64: 1, 128>}, {transform_indices = @transform_2, window_bounds = array<i64: 1, 128>}, {transform_indices = @transform_3, window_bounds = array<i64: 8, 128>}, {pipeline_mode = #tpu.pipeline_mode<synchronous>, transform_indices = @transform_4, window_bounds = array<i64: 8, 1>}, {pipeline_mode = #tpu.pipeline_mode<synchronous>, transform_indices = @transform_5, window_bounds = array<i64: 1, 1>}]} {
    %c0_i32 = arith.constant 0 : i32
    %0 = arith.cmpi eq, %arg0, %c0_i32 : i32
    %1 = arith.extui %0 : i1 to i32
    %c0_i32_0 = arith.constant 0 : i32
    %2 = arith.cmpi ne, %1, %c0_i32_0 : i32
    scf.if %2 {
      %cst_31 = arith.constant 0.000000e+00 : f32
      %57 = vector.broadcast %cst_31 : f32 to vector<1x128xf32>
      %c0_32 = arith.constant 0 : index
      %c0_33 = arith.constant 0 : index
      %58 = vector.load %arg7[%c0_32, %c0_33] : memref<1x128xf32, #tpu.memory_space<vmem>>, vector<1x128xf32>
      tpu.vector_store %arg7[%c0_32, %c0_33], %57 {strides = array<i32>} : memref<1x128xf32, #tpu.memory_space<vmem>>, vector<1x128xf32>,
      %cst_34 = arith.constant 0.000000e+00 : f32
      %59 = vector.broadcast %cst_34 : f32 to vector<1x128xf32>
      %c0_35 = arith.constant 0 : index
      %c0_36 = arith.constant 0 : index
      %60 = vector.load %arg8[%c0_35, %c0_36] : memref<1x128xf32, #tpu.memory_space<vmem>>, vector<1x128xf32>
      tpu.vector_store %arg8[%c0_35, %c0_36], %59 {strides = array<i32>} : memref<1x128xf32, #tpu.memory_space<vmem>>, vector<1x128xf32>,
      %cst_37 = arith.constant 0.000000e+00 : f32
      %61 = vector.broadcast %cst_37 : f32 to vector<1x128xf32>
      %c0_38 = arith.constant 0 : index
      %c0_39 = arith.constant 0 : index
      %62 = vector.load %arg9[%c0_38, %c0_39] : memref<1x128xf32, #tpu.memory_space<vmem>>, vector<1x128xf32>
      tpu.vector_store %arg9[%c0_38, %c0_39], %61 {strides = array<i32>} : memref<1x128xf32, #tpu.memory_space<vmem>>, vector<1x128xf32>,
    } else {
    }
    %c0 = arith.constant 0 : index
    %c0_1 = arith.constant 0 : index
    %3 = vector.load %arg2[%c0, %c0_1] : memref<1x128xi32, #tpu.memory_space<vmem>>, vector<1x128xi32>
    %c0_2 = arith.constant 0 : index
    %c0_3 = arith.constant 0 : index
    %4 = vector.load %arg1[%c0_2, %c0_3] : memref<1x128xf32, #tpu.memory_space<vmem>>, vector<1x128xf32>
    %c0_4 = arith.constant 0 : index
    %c0_5 = arith.constant 0 : index
    %5 = vector.load %arg3[%c0_4, %c0_5] : memref<1x128xf32, #tpu.memory_space<vmem>>, vector<1x128xf32>
    %c0_i32_6 = arith.constant 0 : i32
    %6 = vector.broadcast %c0_i32_6 : i32 to vector<1x128xi32>
    %7 = arith.cmpi sgt, %3, %6 : vector<1x128xi32>
    %cst = arith.constant 1.000000e+00 : f32
    %8 = vector.broadcast %cst : f32 to vector<1x128xf32>
    %9 = arith.subf %8, %4 : vector<1x128xf32>
    %10 = arith.select %7, %4, %9 : vector<1x128xi1>, vector<1x128xf32>
    %11 = math.log %10 : vector<1x128xf32>
    %cst_7 = arith.constant -1.000000e+02 : f32
    %12 = vector.broadcast %cst_7 : f32 to vector<1x128xf32>
    %13 = arith.maximumf %11, %12 : vector<1x128xf32>
    %c0_8 = arith.constant 0 : index
    %c0_9 = arith.constant 0 : index
    %14 = vector.load %arg7[%c0_8, %c0_9] : memref<1x128xf32, #tpu.memory_space<vmem>>, vector<1x128xf32>
    %cst_10 = arith.constant 0.000000e+00 : f32
    %15 = vector.broadcast %cst_10 : f32 to vector<1x128xf32>
    %16 = arith.subf %15, %13 : vector<1x128xf32>
    %17 = arith.mulf %5, %16 : vector<1x128xf32>
    %18 = arith.addf %14, %17 : vector<1x128xf32>
    %c0_11 = arith.constant 0 : index
    %c0_12 = arith.constant 0 : index
    %19 = vector.load %arg7[%c0_11, %c0_12] : memref<1x128xf32, #tpu.memory_space<vmem>>, vector<1x128xf32>
    tpu.vector_store %arg7[%c0_11, %c0_12], %18 {strides = array<i32>} : memref<1x128xf32, #tpu.memory_space<vmem>>, vector<1x128xf32>,
    %c1_i32 = arith.constant 1 : i32
    %20 = vector.broadcast %c1_i32 : i32 to vector<1x128xi32>
    %21 = arith.subi %3, %20 : vector<1x128xi32>
    %22 = tpu.iota {dimensions = array<i32: 0>} : vector<8x128xi32>
    %23 = vector.broadcast %21 : vector<1x128xi32> to vector<8x128xi32>
    %24 = arith.cmpi eq, %22, %23 : vector<8x128xi32>
    %25 = arith.extui %24 : vector<8x128xi1> to vector<8x128xi32>
    %26 = arith.sitofp %25 : vector<8x128xi32> to vector<8x128xf32>
    %c0_13 = arith.constant 0 : index
    %c0_14 = arith.constant 0 : index
    %27 = vector.load %arg4[%c0_13, %c0_14] : memref<8x128xf32, #tpu.memory_space<vmem>>, vector<8x128xf32>
    %c0_15 = arith.constant 0 : index
    %c0_16 = arith.constant 0 : index
    %28 = vector.load %arg5[%c0_15, %c0_16] : memref<8x1xf32, #tpu.memory_space<vmem>>, vector<8x1xf32>
    %29 = arith.mulf %26, %27 : vector<8x128xf32>
    %cst_17 = arith.constant dense<0.000000e+00> : vector<128xf32>
    %30 = vector.multi_reduction <add>, %29, %cst_17 [0] : vector<8x128xf32> to vector<128xf32>
    %31 = vector.shape_cast %30 : vector<128xf32> to vector<1x128xf32>
    %32 = vector.broadcast %28 : vector<8x1xf32> to vector<8x128xf32>
    %33 = arith.mulf %26, %32 : vector<8x128xf32>
    %cst_18 = arith.constant dense<0.000000e+00> : vector<128xf32>
    %34 = vector.multi_reduction <add>, %33, %cst_18 [0] : vector<8x128xf32> to vector<128xf32>
    %35 = vector.shape_cast %34 : vector<128xf32> to vector<1x128xf32>
    %c0_i32_19 = arith.constant 0 : i32
    %36 = vector.broadcast %c0_i32_19 : i32 to vector<1x128xi32>
    %37 = arith.cmpi ne, %3, %36 : vector<1x128xi32>
    %38 = arith.extui %37 : vector<1x128xi1> to vector<1x128xi32>
    %39 = arith.sitofp %38 : vector<1x128xi32> to vector<1x128xf32>
    %cst_20 = arith.constant 1.000000e+00 : f32
    %40 = vector.broadcast %cst_20 : f32 to vector<1x128xf32>
    %41 = arith.select %37, %31, %40 : vector<1x128xi1>, vector<1x128xf32>
    %42 = math.log %41 : vector<1x128xf32>
    %c0_21 = arith.constant 0 : index
    %c0_22 = arith.constant 0 : index
    %43 = vector.load %arg8[%c0_21, %c0_22] : memref<1x128xf32, #tpu.memory_space<vmem>>, vector<1x128xf32>
    %cst_23 = arith.constant 0.000000e+00 : f32
    %44 = vector.broadcast %cst_23 : f32 to vector<1x128xf32>
    %45 = arith.subf %44, %35 : vector<1x128xf32>
    %46 = arith.mulf %45, %42 : vector<1x128xf32>
    %47 = arith.mulf %39, %46 : vector<1x128xf32>
    %48 = arith.addf %43, %47 : vector<1x128xf32>
    %c0_24 = arith.constant 0 : index
    %c0_25 = arith.constant 0 : index
    %49 = vector.load %arg8[%c0_24, %c0_25] : memref<1x128xf32, #tpu.memory_space<vmem>>, vector<1x128xf32>
    tpu.vector_store %arg8[%c0_24, %c0_25], %48 {strides = array<i32>} : memref<1x128xf32, #tpu.memory_space<vmem>>, vector<1x128xf32>,
    %c0_26 = arith.constant 0 : index
    %c0_27 = arith.constant 0 : index
    %50 = vector.load %arg9[%c0_26, %c0_27] : memref<1x128xf32, #tpu.memory_space<vmem>>, vector<1x128xf32>
    %51 = arith.mulf %39, %35 : vector<1x128xf32>
    %52 = arith.addf %50, %51 : vector<1x128xf32>
    %c0_28 = arith.constant 0 : index
    %c0_29 = arith.constant 0 : index
    %53 = vector.load %arg9[%c0_28, %c0_29] : memref<1x128xf32, #tpu.memory_space<vmem>>, vector<1x128xf32>
    tpu.vector_store %arg9[%c0_28, %c0_29], %52 {strides = array<i32>} : memref<1x128xf32, #tpu.memory_space<vmem>>, vector<1x128xf32>,
    %c3_i32 = arith.constant 3 : i32
    %54 = arith.cmpi eq, %arg0, %c3_i32 : i32
    %55 = arith.extui %54 : i1 to i32
    %c0_i32_30 = arith.constant 0 : i32
    %56 = arith.cmpi ne, %55, %c0_i32_30 : i32
    scf.if %56 {
      %c0_31 = arith.constant 0 : index
      %c0_32 = arith.constant 0 : index
      %57 = vector.load %arg7[%c0_31, %c0_32] : memref<1x128xf32, #tpu.memory_space<vmem>>, vector<1x128xf32>
      %cst_33 = arith.constant dense<0.000000e+00> : vector<1xf32>
      %58 = vector.multi_reduction <add>, %57, %cst_33 [1] : vector<1x128xf32> to vector<1xf32>
      %59 = vector.shape_cast %58 : vector<1xf32> to vector<1x1xf32>
      %c0_34 = arith.constant 0 : index
      %c0_35 = arith.constant 0 : index
      %60 = vector.load %arg8[%c0_34, %c0_35] : memref<1x128xf32, #tpu.memory_space<vmem>>, vector<1x128xf32>
      %cst_36 = arith.constant dense<0.000000e+00> : vector<1xf32>
      %61 = vector.multi_reduction <add>, %60, %cst_36 [1] : vector<1x128xf32> to vector<1xf32>
      %62 = vector.shape_cast %61 : vector<1xf32> to vector<1x1xf32>
      %c0_37 = arith.constant 0 : index
      %c0_38 = arith.constant 0 : index
      %63 = vector.load %arg9[%c0_37, %c0_38] : memref<1x128xf32, #tpu.memory_space<vmem>>, vector<1x128xf32>
      %cst_39 = arith.constant dense<0.000000e+00> : vector<1xf32>
      %64 = vector.multi_reduction <add>, %63, %cst_39 [1] : vector<1x128xf32> to vector<1xf32>
      %65 = vector.shape_cast %64 : vector<1xf32> to vector<1x1xf32>
      %cst_40 = arith.constant 2.000000e-03 : f32
      %66 = vector.broadcast %cst_40 : f32 to vector<1x1xf32>
      %67 = arith.mulf %59, %66 : vector<1x1xf32>
      %68 = arith.divf %62, %65 : vector<1x1xf32>
      %69 = arith.addf %67, %68 : vector<1x1xf32>
      %c0_41 = arith.constant 0 : index
      %c0_42 = arith.constant 0 : index
      %70 = vector.load %arg6[%c0_41, %c0_42] : memref<1x1xf32, #tpu.memory_space<vmem>>, vector<1x1xf32>
      tpu.vector_store %arg6[%c0_41, %c0_42], %69 {strides = array<i32>} : memref<1x1xf32, #tpu.memory_space<vmem>>, vector<1x1xf32>,
    } else {
    }
    return
  }
  func.func @transform_0(%arg0: i32) -> (i32, i32) {
    %c0_i32 = arith.constant 0 : i32
    %c0_i32_0 = arith.constant 0 : i32
    return %c0_i32, %arg0 : i32, i32
  }
  func.func @transform_1(%arg0: i32) -> (i32, i32) {
    %c0_i32 = arith.constant 0 : i32
    %c0_i32_0 = arith.constant 0 : i32
    return %c0_i32, %arg0 : i32, i32
  }
  func.func @transform_2(%arg0: i32) -> (i32, i32) {
    %c0_i32 = arith.constant 0 : i32
    %c0_i32_0 = arith.constant 0 : i32
    return %c0_i32, %arg0 : i32, i32
  }
  func.func @transform_3(%arg0: i32) -> (i32, i32) {
    %c0_i32 = arith.constant 0 : i32
    %c0_i32_0 = arith.constant 0 : i32
    return %c0_i32, %arg0 : i32, i32
  }
  func.func @transform_4(%arg0: i32) -> (i32, i32) {
    %c0_i32 = arith.constant 0 : i32
    %c0_i32_0 = arith.constant 0 : i32
    %c0_i32_1 = arith.constant 0 : i32
    return %c0_i32, %c0_i32_0 : i32, i32
  }
  func.func @transform_5(%arg0: i32) -> (i32, i32) {
    %c0_i32 = arith.constant 0 : i32
    %c0_i32_0 = arith.constant 0 : i32
    %c0_i32_1 = arith.constant 0 : i32
    return %c0_i32, %c0_i32_0 : i32, i32
  }
}

</mosaic_0001>

<llo_original>
// kernel: tpu_custom_call.1
$region0: #{tpu_custom_call.1}
  #allocation0 [shape = 'u32[]', space=smem, size = 0x4, offset = 0x4, fixed_abs, tag = 'smem constant byte address 0x4 - core index']
  #allocation1 [shape = 'u32[144,128]{1,0:T(1,128)}', space=vmem, size = 0x12000, scoped, tag = 'internal scratch']
  #allocation2 [shape = 'f32[1,128]{1,0:T(1,128)}', space=vmem, size = 0x200, scoped, tag = 'scratch operand']
  #allocation3 [shape = 'f32[1,128]{1,0:T(1,128)}', space=vmem, size = 0x200, scoped, tag = 'scratch operand']
  #allocation4 [shape = 'f32[1,128]{1,0:T(1,128)}', space=vmem, size = 0x200, scoped, tag = 'scratch operand']
  %s0 = inlined_call_operand.vmem [shape: f32[1,512], index: 0, kind: input, shape index: {}]
  %s1 = inlined_call_operand.vmem [shape: s32[1,512], index: 1, kind: input, shape index: {}]
  %s2 = inlined_call_operand.vmem [shape: f32[1,512], index: 2, kind: input, shape index: {}]
  %s3 = inlined_call_operand.hbm [shape: f32[8,512], index: 3, kind: input, shape index: {}]
  %s4 = inlined_call_operand.vmem [shape: f32[8,1], index: 4, kind: input, shape index: {}]
  %s5 = inlined_call_operand.hbm [shape: f32[1,1], index: 5, kind: output, shape index: {}]
  %s6 = sld [smem:[#allocation0]]
  $region65: #{tpu_custom_call.1} parent=0
    _
  %s8 = ssub.s32 1, %s6
  %s9 = scalar_select 0, %s8, %s6
  $region1: #{tpu_custom_call.1} parent=0
    #allocation5 [shape = 'u8[8192]{0}', space=vmem, size = 0x2000, scoped, tag = 'input window, operand 3']
    #allocation6 [shape = 's32[2]{0}', space=sflag, size = 0x8, scoped, tag = 'scoped memory for tpu_custom_call.1']
    #allocation7 [shape = 's32[2]{0}', space=sflag, size = 0x8, scoped, tag = 'scoped memory for tpu_custom_call.1']
    #allocation8 [shape = 'u8[512]{0}', space=vmem, size = 0x400, scoped, tag = 'output window, operand 0, single buffered']
    %10 = vsyncpa [#allocation6], 0
    %s11 = scalar_lea.sflag [#allocation6], 1
    %12 = vsyncpa %s11, 0
    %13 = vsyncpa [#allocation7], 0
    loop: start=0, step=1, limit=6
    $region2: #{tpu_custom_call.1} parent=1 // loop_pre_header
      _
    $region3: #{tpu_custom_call.1} parent=1 // loop_header
      %s15 = sphi 0, %s19
      %p16 = scmp.ge.s32.totalorder %s15, 6
      %s25 = sphi 0, %s27
      %s28 = sphi 0, %s25
      %s29 = sphi 0, %s28
      %s45 = sphi 0, %s29
      %s51 = sphi 0, %s53
      %s54 = sphi 0, %s51
      %s55 = sphi 0, %s54
      %s71 = sphi 0, %s55
      %s77 = sphi 0, %s79
      %s80 = sphi 0, %s77
      %s81 = sphi 0, %s80
      %s97 = sphi 0, %s81
      %s103 = sphi 0, %s105
      %s106 = sphi 0, %s103
      %s107 = sphi 0, %s106
      %s123 = sphi 0, %s107
      %s127 = sphi 0, %s127
      %s129 = sphi 0, %s127
      %s130 = sphi 0, %s129
      %s144 = sphi 0, %s130
      %s148 = sphi 0, %s148
      %s150 = sphi 0, %s148
      %s151 = sphi 0, %s150
      %s165 = sphi 0, %s151
    $region4: #{tpu_custom_call.1} parent=1 // loop_header_branch
      %18 = sbr.rel (%p16) target = $region8
    $region5: #{tpu_custom_call.1} parent=1 // loop_body
      %s20 = ssub.s32 %s15, 1
      %s21 = ssub.s32 %s15, 2
      %s22 = sadd.s32 %s15, 1
      %s23 = ssub.s32 %s15, %s22
      %p24 = scmp.eq.s32.totalorder %s23, 0
      %s26 = sadd.s32 %s25, 1
      %s27 = scalar_select %p24, %s25, %s26
      %p30 = pneg %p24
      %p31 = scmp.eq.s32.totalorder %s15, 3
      %p32 = por %p30, %p31
      %p33 = scmp.ne.s32.totalorder %s25, %s28
      %p34 = scmp.eq.s32.totalorder %s15, 0
      %p35 = por %p33, %p34
      %p36 = scmp.ne.s32.totalorder %s25, %s28
      %p37 = scmp.eq.s32.totalorder %s20, 3
      %p38 = por %p36, %p37
      %p39 = scmp.ne.s32.totalorder %s28, %s29
      %p40 = scmp.eq.s32.totalorder %s20, 0
      %p41 = por %p39, %p40
      %p42 = scmp.ne.s32.totalorder %s28, %s29
      %p43 = scmp.eq.s32.totalorder %s21, 3
      %p44 = por %p42, %p43
      %p46 = scmp.ne.s32.totalorder %s29, %s45
      %p47 = scmp.eq.s32.totalorder %s21, 0
      %p48 = por %p46, %p47
      %s49 = ssub.s32 %s15, %s22
      %p50 = scmp.eq.s32.totalorder %s49, 0
      %s52 = sadd.s32 %s51, 1
      %s53 = scalar_select %p50, %s51, %s52
      %p56 = pneg %p50
      %p57 = scmp.eq.s32.totalorder %s15, 3
      %p58 = por %p56, %p57
      %p59 = scmp.ne.s32.totalorder %s51, %s54
      %p60 = scmp.eq.s32.totalorder %s15, 0
      %p61 = por %p59, %p60
      %p62 = scmp.ne.s32.totalorder %s51, %s54
      %p63 = scmp.eq.s32.totalorder %s20, 3
      %p64 = por %p62, %p63
      %p65 = scmp.ne.s32.totalorder %s54, %s55
      %p66 = scmp.eq.s32.totalorder %s20, 0
      %p67 = por %p65, %p66
      %p68 = scmp.ne.s32.totalorder %s54, %s55
      %p69 = scmp.eq.s32.totalorder %s21, 3
      %p70 = por %p68, %p69
      %p72 = scmp.ne.s32.totalorder %s55, %s71
      %p73 = scmp.eq.s32.totalorder %s21, 0
      %p74 = por %p72, %p73
      %s75 = ssub.s32 %s15, %s22
      %p76 = scmp.eq.s32.totalorder %s75, 0
      %s78 = sadd.s32 %s77, 1
      %s79 = scalar_select %p76, %s77, %s78
      %p82 = pneg %p76
      %p83 = scmp.eq.s32.totalorder %s15, 3
      %p84 = por %p82, %p83
      %p85 = scmp.ne.s32.totalorder %s77, %s80
      %p86 = scmp.eq.s32.totalorder %s15, 0
      %p87 = por %p85, %p86
      %p88 = scmp.ne.s32.totalorder %s77, %s80
      %p89 = scmp.eq.s32.totalorder %s20, 3
      %p90 = por %p88, %p89
      %p91 = scmp.ne.s32.totalorder %s80, %s81
      %p92 = scmp.eq.s32.totalorder %s20, 0
      %p93 = por %p91, %p92
      %p94 = scmp.ne.s32.totalorder %s80, %s81
      %p95 = scmp.eq.s32.totalorder %s21, 3
      %p96 = por %p94, %p95
      %p98 = scmp.ne.s32.totalorder %s81, %s97
      %p99 = scmp.eq.s32.totalorder %s21, 0
      %p100 = por %p98, %p99
      %s101 = ssub.s32 %s15, %s22
      %p102 = scmp.eq.s32.totalorder %s101, 0
      %s104 = sadd.s32 %s103, 1
      %s105 = scalar_select %p102, %s103, %s104
      %p108 = pneg %p102
      %p109 = scmp.eq.s32.totalorder %s15, 3
      %p110 = por %p108, %p109
      %p111 = scmp.ne.s32.totalorder %s103, %s106
      %p112 = scmp.eq.s32.totalorder %s15, 0
      %p113 = por %p111, %p112
      %p114 = scmp.ne.s32.totalorder %s103, %s106
      %p115 = scmp.eq.s32.totalorder %s20, 3
      %p116 = por %p114, %p115
      %p117 = scmp.ne.s32.totalorder %s106, %s107
      %p118 = scmp.eq.s32.totalorder %s20, 0
      %p119 = por %p117, %p118
      %p120 = scmp.ne.s32.totalorder %s106, %s107
      %p121 = scmp.eq.s32.totalorder %s21, 3
      %p122 = por %p120, %p121
      %p124 = scmp.ne.s32.totalorder %s107, %s123
      %p125 = scmp.eq.s32.totalorder %s21, 0
      %p126 = por %p124, %p125
      %s128 = sadd.s32 %s127, 1
      %p131 = scmp.eq.s32.totalorder %s15, 3
      %p132 = scmp.ne.s32.totalorder %s127, %s129
      %p133 = scmp.eq.s32.totalorder %s15, 0
      %p134 = por %p132, %p133
      %p135 = scmp.ne.s32.totalorder %s127, %s129
      %p136 = scmp.eq.s32.totalorder %s20, 3
      %p137 = por %p135, %p136
      %p138 = scmp.ne.s32.totalorder %s129, %s130
      %p139 = scmp.eq.s32.totalorder %s20, 0
      %p140 = por %p138, %p139
      %p141 = scmp.ne.s32.totalorder %s129, %s130
      %p142 = scmp.eq.s32.totalorder %s21, 3
      %p143 = por %p141, %p142
      %p145 = scmp.ne.s32.totalorder %s130, %s144
      %p146 = scmp.eq.s32.totalorder %s21, 0
      %p147 = por %p145, %p146
      %s149 = sadd.s32 %s148, 1
      %p152 = scmp.eq.s32.totalorder %s15, 3
      %p153 = scmp.ne.s32.totalorder %s148, %s150
      %p154 = scmp.eq.s32.totalorder %s15, 0
      %p155 = por %p153, %p154
      %p156 = scmp.ne.s32.totalorder %s148, %s150
      %p157 = scmp.eq.s32.totalorder %s20, 3
      %p158 = por %p156, %p157
      %p159 = scmp.ne.s32.totalorder %s150, %s151
      %p160 = scmp.eq.s32.totalorder %s20, 0
      %p161 = por %p159, %p160
      %p162 = scmp.ne.s32.totalorder %s150, %s151
      %p163 = scmp.eq.s32.totalorder %s21, 3
      %p164 = por %p162, %p163
      %p166 = scmp.ne.s32.totalorder %s151, %s165
      %p167 = scmp.eq.s32.totalorder %s21, 0
      %p168 = por %p166, %p167
      %p169 = scmp.le.s32.totalorder 1, %s15
      %p170 = scmp.lt.s32.totalorder %s15, 5
      %p171 = pnand %p169, %p170
      %p172 = pneg %p171
      // Predicated region
      $region9: #{tpu_custom_call.1} parent=5 // pred_check
        _
      $region10: #{tpu_custom_call.1} parent=5 // pred_check_branch
        %174 = sbr.rel (%p171) target = $region12
      $region11: #{tpu_custom_call.1} parent=5 // pred_region
        %s175 = ssub.s32 %s15, 1
        // Predicated region
        $region13: #{tpu_custom_call.1} parent=11 // pred_check
          %p176 = pneg %p140
        $region14: #{tpu_custom_call.1} parent=11 // pred_check_branch
          %178 = sbr.rel (%p176) target = $region16
        $region15: #{tpu_custom_call.1} parent=11 // pred_region
          _
        $region16: #{tpu_custom_call.1} parent=11 // pred_fallthru
          _
      $region12: #{tpu_custom_call.1} parent=5 // pred_fallthru
        _
      %p179 = scmp.lt.s32.totalorder %s15, 4
      // Predicated region
      $region17: #{tpu_custom_call.1} parent=5 // pred_check
        %p180 = pneg %p179
      $region18: #{tpu_custom_call.1} parent=5 // pred_check_branch
        %182 = sbr.rel (%p180) target = $region20
      $region19: #{tpu_custom_call.1} parent=5 // pred_region
        // Predicated region
        $region21: #{tpu_custom_call.1} parent=19 // pred_check
          %p183 = pneg %p35
        $region22: #{tpu_custom_call.1} parent=19 // pred_check_branch
          %185 = sbr.rel (%p183) target = $region24
        $region23: #{tpu_custom_call.1} parent=19 // pred_region
          %p186 = scmp.lt.s32.totalorder %s15, 3
          %s187 = scalar_select %p186, %s15, 3
          %s188 = scalar_lea.vmem %s0, %s187
        $region24: #{tpu_custom_call.1} parent=19 // pred_fallthru
          _
        // Predicated region
        $region25: #{tpu_custom_call.1} parent=19 // pred_check
          %p189 = pneg %p61
        $region26: #{tpu_custom_call.1} parent=19 // pred_check_branch
          %191 = sbr.rel (%p189) target = $region28
        $region27: #{tpu_custom_call.1} parent=19 // pred_region
          %p192 = scmp.lt.s32.totalorder %s15, 3
          %s193 = scalar_select %p192, %s15, 3
          %s194 = scalar_lea.vmem %s1, %s193
        $region28: #{tpu_custom_call.1} parent=19 // pred_fallthru
          _
        // Predicated region
        $region29: #{tpu_custom_call.1} parent=19 // pred_check
          %p195 = pneg %p87
        $region30: #{tpu_custom_call.1} parent=19 // pred_check_branch
          %197 = sbr.rel (%p195) target = $region32
        $region31: #{tpu_custom_call.1} parent=19 // pred_region
          %p198 = scmp.lt.s32.totalorder %s15, 3
          %s199 = scalar_select %p198, %s15, 3
          %s200 = scalar_lea.vmem %s2, %s199
        $region32: #{tpu_custom_call.1} parent=19 // pred_fallthru
          _
        // Predicated region
        $region33: #{tpu_custom_call.1} parent=19 // pred_check
          %p201 = pneg %p113
        $region34: #{tpu_custom_call.1} parent=19 // pred_check_branch
          %203 = sbr.rel (%p201) target = $region36
        $region35: #{tpu_custom_call.1} parent=19 // pred_region
          %s204 = sand.u32 %s103, 1
          %s205 = scalar_lea.sflag [#allocation6], %s204
          %s206 = sand.u32 %s103, 1
          %s207 = smul.addr %s206, 8
          %s208 = scalar_lea.vmem [#allocation5], %s207
          %s210 = ssub.s32 128, 128
          %211 = vsyncadd %s205, %s210
          %s212 = smul.addr %s15, 128
          %s213 = scalar_lea.hbm %s3, %s212
          %s215 = sshll.u32 %s208, 4
          %s216 = int_to_ptr.vmem [resolvable:$true] %s215
          %218 = dma.hbm_to_vmem [thread:$0]  %s213, 128, %s216, %s205
        $region36: #{tpu_custom_call.1} parent=19 // pred_fallthru
          _
      $region20: #{tpu_custom_call.1} parent=5 // pred_fallthru
        _
      %p219 = scmp.le.s32.totalorder 1, %s15
      %p220 = scmp.lt.s32.totalorder %s15, 5
      %p221 = pnand %p219, %p220
      %p222 = pneg %p221
      // Predicated region
      $region37: #{tpu_custom_call.1} parent=5 // pred_check
        _
      $region38: #{tpu_custom_call.1} parent=5 // pred_check_branch
        %224 = sbr.rel (%p221) target = $region40
      $region39: #{tpu_custom_call.1} parent=5 // pred_region
        %s225 = ssub.s32 %s15, 1
        %s226 = sand.u32 %s106, 1
        %s227 = scalar_lea.sflag [#allocation6], %s226
        %s228 = sand.u32 %s106, 1
        %s229 = smul.addr %s228, 8
        %s230 = scalar_lea.vmem [#allocation5], %s229
        // Predicated region
        $region41: #{tpu_custom_call.1} parent=39 // pred_check
          %p231 = pneg %p119
        $region42: #{tpu_custom_call.1} parent=39 // pred_check_branch
          %233 = sbr.rel (%p231) target = $region44
        $region43: #{tpu_custom_call.1} parent=39 // pred_region
          %234 = dma.done %s227, 128
        $region44: #{tpu_custom_call.1} parent=39 // pred_fallthru
          _
        %p235 = scmp.lt.s32.totalorder %s20, 3
        %s236 = scalar_select %p235, %s20, 3
        %s237 = scalar_lea.vmem %s0, %s236
        %p238 = pneg %p41
        %p239 = pneg %p38
        %p240 = scmp.lt.s32.totalorder %s20, 3
        %s241 = scalar_select %p240, %s20, 3
        %s242 = scalar_lea.vmem %s1, %s241
        %p243 = pneg %p67
        %p244 = pneg %p64
        %p245 = scmp.lt.s32.totalorder %s20, 3
        %s246 = scalar_select %p245, %s20, 3
        %s247 = scalar_lea.vmem %s2, %s246
        %p248 = pneg %p93
        %p249 = pneg %p90
        %s250 = sand.u32 %s106, 1
        %s251 = scalar_lea.sflag [#allocation6], %s250
        %s252 = sand.u32 %s106, 1
        %s253 = smul.addr %s252, 8
        %s254 = scalar_lea.vmem [#allocation5], %s253
        %p255 = pneg %p119
        %p256 = pneg %p116
        %p257 = pneg %p140
        %p258 = pneg %p137
        %p259 = pneg %p161
        %p260 = pneg %p158
        %p261 = scmp.lt.s32.totalorder %s20, 3
        %s262 = scalar_select %p261, %s20, 3
        %s263 = scalar_lea.vmem %s0, %s262
        %p264 = scmp.lt.s32.totalorder %s20, 3
        %s265 = scalar_select %p264, %s20, 3
        %s266 = scalar_lea.vmem %s1, %s265
        %p267 = scmp.lt.s32.totalorder %s20, 3
        %s268 = scalar_select %p267, %s20, 3
        %s269 = scalar_lea.vmem %s2, %s268
        %p270 = scmp.eq.s32.totalorder %s20, 0
        // Predicated region
        $region45: #{tpu_custom_call.1} parent=39 // pred_check
          %p271 = pneg %p270
        $region46: #{tpu_custom_call.1} parent=39 // pred_check_branch
          %273 = sbr.rel (%p271) target = $region48
        $region47: #{tpu_custom_call.1} parent=39 // pred_region
          %274 = vst [vmem:[#allocation2] sm:$0x1] 0.0
          %275 = vst [vmem:[#allocation3] sm:$0x1] 0.0
          %276 = vst [vmem:[#allocation4] sm:$0x1] 0.0
        $region48: #{tpu_custom_call.1} parent=39 // pred_fallthru
          _
        %v277 = vld [vmem:[%s266] sm:$0x1]
        %v278 = vld [vmem:[%s263] sm:$0x1]
        %v279 = vld [vmem:[%s269] sm:$0x1]
        %vm280 = vcmp.gt.s32.totalorder %v277, 0
        %v281 = vsub.f32 1.0, %v278
        %v282 = vsel %vm280, %v278, %v281
        %v283 = vlog2.pop %v282
        %v284 = vmul.f32 %v283, 0.6931472
        %v285 = vmax.f32 %v284, -100.0
        %v286 = vld [vmem:[#allocation2] sm:$0x1]
        %v287 = vsub.f32 0.0, %v285
        %v288 = vmul.f32 %v279, %v287
        %v289 = vadd.f32 %v286, %v288
        %290 = vst [vmem:[#allocation2] sm:$0x1] %v289
        %v291 = vsub.s32 %v277, 1
        %v292 = vlaneseq
        %v293 = vshrl.u32 %v292, 7
        %v294 = vlaneseq
        %v295 = vshrl.u32 %v294, 7
        %v296 = vsub.s32 0, %v295
        %v297 = vrot.slane %v291, %v296
        %vm298 = vcmp.eq.s32.totalorder %v293, %v297
        %v299 = vsel %vm298, 1, 0
        %v300 = vcvt.s32.f32 %v299
        %v301 = vld [vmem:[%s230] sm:$0xff]
        %v302 = vld [vmem:[%s4] sm:$0xff]
        %v303 = vmul.f32 %v300, %v301
        %v304 = vrot.slane %v303, 4
        %v305 = vadd.f32 %v303, %v304
        %v306 = vrot.slane %v305, 2
        %v307 = vadd.f32 %v305, %v306
        %v308 = vrot.slane %v307, 1
        %v309 = vadd.f32 %v307, %v308
        %311 = vset.pattern.permute.xlu0 0
        %312 = vperm.xlu0 %311, %v302
        %v313 = vpop.permute.xlu0 %312
        %v315 = vmul.f32 %v300, %v313
        %v316 = vrot.slane %v315, 4
        %v317 = vadd.f32 %v315, %v316
        %v318 = vrot.slane %v317, 2
        %v319 = vadd.f32 %v317, %v318
        %v320 = vrot.slane %v319, 1
        %v321 = vadd.f32 %v319, %v320
        %vm322 = vcmp.ne.s32.totalorder %v277, 0
        %v323 = vsel %vm322, 1, 0
        %v324 = vcvt.s32.f32 %v323
        %v325 = vsel %vm322, %v309, 1.0
        %v326 = vlog2.pop %v325
        %v327 = vmul.f32 %v326, 0.6931472
        %v328 = vld [vmem:[#allocation3] sm:$0x1]
        %v329 = vsub.f32 0.0, %v321
        %v330 = vmul.f32 %v329, %v327
        %v331 = vmul.f32 %v324, %v330
        %v332 = vadd.f32 %v328, %v331
        %333 = vst [vmem:[#allocation3] sm:$0x1] %v332
        %v334 = vld [vmem:[#allocation4] sm:$0x1]
        %v335 = vmul.f32 %v324, %v321
        %v336 = vadd.f32 %v334, %v335
        %337 = vst [vmem:[#allocation4] sm:$0x1] %v336
        %p338 = scmp.eq.s32.totalorder %s20, 3
        // Predicated region
        $region49: #{tpu_custom_call.1} parent=39 // pred_check
          %p339 = pneg %p338
        $region50: #{tpu_custom_call.1} parent=39 // pred_check_branch
          %341 = sbr.rel (%p339) target = $region52
        $region51: #{tpu_custom_call.1} parent=39 // pred_region
          %v342 = vld [vmem:[#allocation2] sm:$0x1]
          %vm343 = vcmask 1040384
          %v344 = vsel %vm343, %v342, 0.0
          %345 = vadd.xlane.f32.xlu0 %v344
          %v346 = vpop.xlane.xlu0 %345
          %v347 = vld [vmem:[#allocation3] sm:$0x1]
          %v348 = vsel %vm343, %v347, 0.0
          %349 = vadd.xlane.f32.xlu0 %v348
          %v350 = vpop.xlane.xlu0 %349
          %v351 = vld [vmem:[#allocation4] sm:$0x1]
          %v352 = vsel %vm343, %v351, 0.0
          %353 = vadd.xlane.f32.xlu0 %v352
          %v354 = vpop.xlane.xlu0 %353
          %v355 = vmul.f32 %v346, 0.002
          %v356 = vrcp.pop %v354
          %v357 = vmul.f32 %v350, %v356
          %v358 = vadd.f32 %v355, %v357
          %vm359 = vcmask 0
          %360 = vst.msk [vmem:[#allocation8] sm:$0x1] %vm359, %v358
        $region52: #{tpu_custom_call.1} parent=39 // pred_fallthru
          _
        // Predicated region
        $region53: #{tpu_custom_call.1} parent=39 // pred_check
          %p361 = pneg %p158
        $region54: #{tpu_custom_call.1} parent=39 // pred_check_branch
          %363 = sbr.rel (%p361) target = $region56
        $region55: #{tpu_custom_call.1} parent=39 // pred_region
          %s365 = ssub.s32 16, 16
          %366 = vsyncadd [#allocation7], %s365
          %s368 = sshll.u32 [#allocation8], 4
          %s369 = int_to_ptr.vmem [resolvable:$true] %s368
          %371 = dma.vmem_to_hbm [thread:$0]  %s369, 16, %s5, [#allocation7]
        $region56: #{tpu_custom_call.1} parent=39 // pred_fallthru
          _
        // Predicated region
        $region57: #{tpu_custom_call.1} parent=39 // pred_check
          %p372 = pneg %p158
        $region58: #{tpu_custom_call.1} parent=39 // pred_check_branch
          %374 = sbr.rel (%p372) target = $region60
        $region59: #{tpu_custom_call.1} parent=39 // pred_region
          %375 = dma.done [#allocation7], 16
        $region60: #{tpu_custom_call.1} parent=39 // pred_fallthru
          _
      $region40: #{tpu_custom_call.1} parent=5 // pred_fallthru
        _
      %p376 = scmp.le.s32.totalorder 2, %s15
      // Predicated region
      $region61: #{tpu_custom_call.1} parent=5 // pred_check
        %p377 = pneg %p376
      $region62: #{tpu_custom_call.1} parent=5 // pred_check_branch
        %379 = sbr.rel (%p377) target = $region64
      $region63: #{tpu_custom_call.1} parent=5 // pred_region
        %s380 = ssub.s32 %s15, 2
      $region64: #{tpu_custom_call.1} parent=5 // pred_fallthru
        _
    $region6: #{tpu_custom_call.1} parent=1 // loop_footer
      %s19 = sadd.s32 1, %s15
    $region7: #{tpu_custom_call.1} parent=1 // loop_footer_branch
      %14 = sbr.rel target = $region3
    $region8: #{tpu_custom_call.1} parent=1 // loop_exit
      _
    %381 = vsyncpa [#allocation6], 1
    %s382 = scalar_lea.sflag [#allocation6], 1
    %383 = vsyncpa %s382, 1
    %384 = vsyncpa [#allocation7], 1
    %s385 = scalar_lea.sflag [#allocation7], 1
    %386 = vsyncpa %s385, 1

</llo_original>
